<compile_context>
chip_gen: v6e
topology: v6e:2x2x1
jax: 0.10.0
libtpu: 0.0.40
codegen_flags: <defaults>
</compile_context>

<pallas_src>
import functools

import jax
import jax.numpy as jnp
from jax.experimental import pallas as pl
from jax.experimental.pallas import tpu as pltpu


def _se_kernel(x_ref, w1_ref, w2_ref, out_ref, *, inv_hw):
    # x_ref: (bt, C, HWp)   w1_ref: (C, Cr)   w2_ref: (Cr, C)   out_ref: (bt, C, HWp)
    x = x_ref[...]                                     # native dtype, never copied to f32

    # ---- Squeeze: global average pool over (zero-padded) spatial lanes.
    # Upcast happens inside the lane reduction; divide by the TRUE H*W.
    pooled = jnp.sum(x.astype(jnp.float32), axis=-1) * inv_hw      # (bt, C) f32

    # ---- Excitation: FC -> ReLU -> FC -> Sigmoid, all f32 on the idle MXU.
    w1 = w1_ref[...].astype(jnp.float32)               # (C, Cr)
    w2 = w2_ref[...].astype(jnp.float32)               # (Cr, C)
    h = jnp.maximum(jnp.dot(pooled, w1, preferred_element_type=jnp.float32), 0.0)
    gate = jax.nn.sigmoid(jnp.dot(h, w2, preferred_element_type=jnp.float32))  # (bt, C)

    # ---- Scale: broadcast per-(sample, channel) gate over spatial lanes.
    # Multiply in x's dtype (bf16-native on v6e/v7x; compiler upcasts on v5e).
    out_ref[...] = x * gate[:, :, None].astype(x.dtype)


def se_layer(x_nchw, w1, w2, *, block_b=None, vmem_limit_bytes=None):
    """SELayer forward. x_nchw: (B, C, H, W); w1: (C, C//r); w2: (C//r, C)."""
    B, C, H, W = x_nchw.shape
    Cr = w1.shape[1]
    HW = H * W
    # Lane-dense spatial axis: pad HW up to a multiple of 128 (zero pad).
    HWp = ((HW + 127) // 128) * 128
    x_flat = x_nchw.reshape(B, C, HW)
    if HWp != HW:
        x_flat = jnp.pad(x_flat, ((0, 0), (0, 0), (0, HWp - HW)))

    itemsize = x_flat.dtype.itemsize
    slab_bytes = C * HWp * itemsize                    # one sample's (C, HWp) slab

    if block_b is None:
        vmem_cap = max(1, (4 << 20) // max(slab_bytes, 1))   # ~4 MiB per buffer (v7x-safe)
        floor_b = max(1, (1 << 20) // max(slab_bytes, 1))    # keep tiles >= ~1 MiB
        step_cap = max(1, B // 4)                            # aim for >= ~4 grid steps
        block_b = min(B, vmem_cap, max(step_cap, min(floor_b, vmem_cap, B)))
    grid_b = pl.cdiv(B, block_b)

    tile_bytes = block_b * slab_bytes
    weight_bytes = (w1.size * w1.dtype.itemsize) + (w2.size * w2.dtype.itemsize)
    if vmem_limit_bytes is None:
        # 2 double-buffers (x in, out) + weights + temporaries/slack; stay well
        # under v7x's 64 MiB physical VMEM.
        needed = 4 * tile_bytes + 4 * weight_bytes + (4 << 20)
        vmem_limit_bytes = int(min(max(needed, 16 << 20), 48 << 20))

    cost = pl.CostEstimate(
        flops=2 * B * C * HWp + 2 * B * C * Cr * 2,    # pool + scale + two FCs
        transcendentals=B * C,                         # sigmoid
        bytes_accessed=2 * B * C * HWp * itemsize + weight_bytes,
    )

    kernel = functools.partial(_se_kernel, inv_hw=1.0 / float(HW))

    out_flat = pl.pallas_call(
        kernel,
        out_shape=jax.ShapeDtypeStruct((B, C, HWp), x_nchw.dtype),
        grid_spec=pltpu.PrefetchScalarGridSpec(
            num_scalar_prefetch=0,
            grid=(grid_b,),
            in_specs=[
                pl.BlockSpec((block_b, C, HWp), lambda i: (i, 0, 0)),
                pl.BlockSpec((C, Cr), lambda i: (0, 0)),
                pl.BlockSpec((Cr, C), lambda i: (0, 0)),
            ],
            out_specs=pl.BlockSpec((block_b, C, HWp), lambda i: (i, 0, 0)),
        ),
        compiler_params=pltpu.CompilerParams(
            dimension_semantics=("parallel",),         # batch tiles are independent
            vmem_limit_bytes=vmem_limit_bytes,
        ),
        cost_estimate=cost,
    )(x_flat, w1, w2)

    if HWp != HW:
        out_flat = out_flat[:, :, :HW]
    return out_flat.reshape(B, C, H, W)


def se_layer_ref(x_nchw, w1, w2):
    """Pure-JAX reference mirroring the PyTorch module."""
    pooled = jnp.mean(x_nchw, axis=(2, 3))             # (B, C)
    h = jnp.maximum(pooled @ w1, 0.0)                  # (B, Cr)
    y = jax.nn.sigmoid(h @ w2)                         # (B, C)
    return x_nchw * y[:, :, None, None]


if __name__ == "__main__":
    # Shapes consistent with SELayer(channel=32, reduction=16).
    B, C, H, W = 2, 32, 8, 8
    reduction = 16
    Cr = C // reduction

    key = jax.random.PRNGKey(0)
    kx, k1, k2 = jax.random.split(key, 3)

    x = jax.random.normal(kx, (B, C, H, W), dtype=jnp.float32)
    # nn.Linear(channel, channel//r, bias=False).weight has shape (Cr, C);
    # forward does pooled @ W.T, so we store the transposed weights.
    w1 = (jax.random.normal(k1, (C, Cr), dtype=jnp.float32)
          * (1.0 / jnp.sqrt(C)))
    w2 = (jax.random.normal(k2, (Cr, C), dtype=jnp.float32)
          * (1.0 / jnp.sqrt(Cr)))

    out = jax.block_until_ready(se_layer(x, w1, w2))
    ref = se_layer_ref(x, w1, w2)

    assert out.shape == (B, C, H, W)
    assert jnp.allclose(out, ref, atol=1e-5, rtol=1e-5)

    print("KERNEL_OK")
</pallas_src>

<mosaic_0001>
module attributes {stable_mosaic.version = 11 : i64} {
  func.func @_se_kernel(%arg0: i32, %arg1: memref<2x32x128xf32, #tpu.memory_space<vmem>>, %arg2: memref<32x2xf32, #tpu.memory_space<vmem>>, %arg3: memref<2x32xf32, #tpu.memory_space<vmem>>, %arg4: memref<2x32x128xf32, #tpu.memory_space<vmem>>) attributes {dimension_semantics = [#tpu.dimension_semantics<parallel>], iteration_bounds = array<i64: 1>, scalar_prefetch = 0 : i64, scratch_operands = 0 : i64, tpu.core_type = #tpu.core_type<tc>, window_params = [{transform_indices = @transform_0, window_bounds = array<i64: 2, 32, 128>}, {pipeline_mode = #tpu.pipeline_mode<synchronous>, transform_indices = @transform_1, window_bounds = array<i64: 32, 2>}, {pipeline_mode = #tpu.pipeline_mode<synchronous>, transform_indices = @transform_2, window_bounds = array<i64: 2, 32>}, {transform_indices = @transform_3, window_bounds = array<i64: 2, 32, 128>}]} {
    %c0 = arith.constant 0 : index
    %c0_0 = arith.constant 0 : index
    %c0_1 = arith.constant 0 : index
    %0 = vector.load %arg1[%c0, %c0_0, %c0_1] : memref<2x32x128xf32, #tpu.memory_space<vmem>>, vector<2x32x128xf32>
    %cst = arith.constant dense<0.000000e+00> : vector<2x32xf32>
    %1 = vector.multi_reduction <add>, %0, %cst [2] : vector<2x32x128xf32> to vector<2x32xf32>
    %cst_2 = arith.constant 1.562500e-02 : f32
    %2 = vector.broadcast %cst_2 : f32 to vector<2x32xf32>
    %3 = arith.mulf %1, %2 : vector<2x32xf32>
    %c0_3 = arith.constant 0 : index
    %c0_4 = arith.constant 0 : index
    %4 = vector.load %arg2[%c0_3, %c0_4] : memref<32x2xf32, #tpu.memory_space<vmem>>, vector<32x2xf32>
    %c0_5 = arith.constant 0 : index
    %c0_6 = arith.constant 0 : index
    %5 = vector.load %arg3[%c0_5, %c0_6] : memref<2x32xf32, #tpu.memory_space<vmem>>, vector<2x32xf32>
    %cst_7 = arith.constant dense<0.000000e+00> : vector<2x2xf32>
    %6 = tpu.matmul %3, %4, %cst_7 {dimension_numbers = #tpu.dot_dimension_numbers<[1], [0], [0], [1], [0, 0, 1, 1], [], []>} : vector<2x32xf32>, vector<32x2xf32>, vector<2x2xf32> -> vector<2x2xf32>
    %cst_8 = arith.constant 0.000000e+00 : f32
    %7 = vector.broadcast %cst_8 : f32 to vector<2x2xf32>
    %8 = arith.maximumf %6, %7 : vector<2x2xf32>
    %cst_9 = arith.constant dense<0.000000e+00> : vector<2x32xf32>
    %9 = tpu.matmul %8, %5, %cst_9 {dimension_numbers = #tpu.dot_dimension_numbers<[1], [0], [0], [1], [0, 0, 1, 1], [], []>} : vector<2x2xf32>, vector<2x32xf32>, vector<2x32xf32> -> vector<2x32xf32>
    %10 = arith.negf %9 : vector<2x32xf32>
    %11 = math.exp %10 : vector<2x32xf32>
    %cst_10 = arith.constant 1.000000e+00 : f32
    %12 = vector.broadcast %cst_10 : f32 to vector<2x32xf32>
    %13 = arith.addf %12, %11 : vector<2x32xf32>
    %14 = arith.divf %12, %13 : vector<2x32xf32>
    %15 = vector.shape_cast %14 : vector<2x32xf32> to vector<2x32x1xf32>
    %16 = vector.broadcast %15 : vector<2x32x1xf32> to vector<2x32x128xf32>
    %17 = arith.mulf %0, %16 : vector<2x32x128xf32>
    %c0_11 = arith.constant 0 : index
    %c0_12 = arith.constant 0 : index
    %c0_13 = arith.constant 0 : index
    %18 = vector.load %arg4[%c0_11, %c0_12, %c0_13] : memref<2x32x128xf32, #tpu.memory_space<vmem>>, vector<2x32x128xf32>
    tpu.vector_store %arg4[%c0_11, %c0_12, %c0_13], %17 {strides = array<i32>} : memref<2x32x128xf32, #tpu.memory_space<vmem>>, vector<2x32x128xf32>,
    return
  }
  func.func @transform_0(%arg0: i32) -> (i32, i32, i32) {
    %c0_i32 = arith.constant 0 : i32
    %c0_i32_0 = arith.constant 0 : i32
    %c0_i32_1 = arith.constant 0 : i32
    return %arg0, %c0_i32, %c0_i32_0 : i32, i32, i32
  }
  func.func @transform_1(%arg0: i32) -> (i32, i32) {
    %c0_i32 = arith.constant 0 : i32
    %c0_i32_0 = arith.constant 0 : i32
    %c0_i32_1 = arith.constant 0 : i32
    return %c0_i32, %c0_i32_0 : i32, i32
  }
  func.func @transform_2(%arg0: i32) -> (i32, i32) {
    %c0_i32 = arith.constant 0 : i32
    %c0_i32_0 = arith.constant 0 : i32
    %c0_i32_1 = arith.constant 0 : i32
    return %c0_i32, %c0_i32_0 : i32, i32
  }
  func.func @transform_3(%arg0: i32) -> (i32, i32, i32) {
    %c0_i32 = arith.constant 0 : i32
    %c0_i32_0 = arith.constant 0 : i32
    %c0_i32_1 = arith.constant 0 : i32
    return %arg0, %c0_i32, %c0_i32_0 : i32, i32, i32
  }
}

</mosaic_0001>

<llo_original>
// kernel: tpu_custom_call.1
$region0: #{tpu_custom_call.1}
  #allocation0 [shape = 'u32[]', space=smem, size = 0x4, offset = 0x4, fixed_abs, tag = 'smem constant byte address 0x4 - core index']
  #allocation1 [shape = 'u32[144,128]{1,0:T(1,128)}', space=vmem, size = 0x12000, scoped, tag = 'internal scratch']
  %s0 = inlined_call_operand.hbm [shape: f32[2,32,128], index: 0, kind: input, shape index: {}]
  %s1 = inlined_call_operand.vmem [shape: f32[32,2], index: 1, kind: input, shape index: {}]
  %s2 = inlined_call_operand.vmem [shape: f32[2,32], index: 2, kind: input, shape index: {}]
  %s3 = inlined_call_operand.hbm [shape: f32[2,32,128], index: 3, kind: output, shape index: {}]
  %s4 = sld [smem:[#allocation0]]
  $region26: #{tpu_custom_call.1} parent=0
    _
  %s6 = ssub.s32 1, %s4
  %s7 = scalar_select 0, %s6, %s4
  $region1: #{tpu_custom_call.1} parent=0
    #allocation2 [shape = 'u8[32768]{0}', space=vmem, size = 0x8000, scoped, tag = 'input window, operand 0, single buffered']
    #allocation3 [shape = 's32[1]{0}', space=sflag, size = 0x4, scoped, tag = 'scoped memory for tpu_custom_call.1']
    #allocation4 [shape = 's32[1]{0}', space=sflag, size = 0x4, scoped, tag = 'scoped memory for tpu_custom_call.1']
    #allocation5 [shape = 'u8[32768]{0}', space=vmem, size = 0x8000, scoped, tag = 'output window, operand 0, single buffered']
    %8 = vsyncpa [#allocation3], 0
    %9 = vsyncpa [#allocation4], 0
    // Predicated region
    $region2: #{tpu_custom_call.1} parent=1 // pred_check
      _
    $region3: #{tpu_custom_call.1} parent=1 // pred_check_branch
      %11 = sbr.rel (0) target = $region5
    $region4: #{tpu_custom_call.1} parent=1 // pred_region
      %s13 = ssub.s32 1024, 1024
      %14 = vsyncadd [#allocation3], %s13
      %s15 = sshll.u32 [#allocation2], 4
      %s16 = int_to_ptr.vmem [resolvable:$true] %s15
      %21 = dma.hbm_to_vmem [thread:$0]  %s0, 1024, %s16, [#allocation3], 128, 128, 8
    $region5: #{tpu_custom_call.1} parent=1 // pred_fallthru
      _
    // Predicated region
    $region6: #{tpu_custom_call.1} parent=1 // pred_check
      _
    $region7: #{tpu_custom_call.1} parent=1 // pred_check_branch
      %23 = sbr.rel (0) target = $region9
    $region8: #{tpu_custom_call.1} parent=1 // pred_region
      _
    $region9: #{tpu_custom_call.1} parent=1 // pred_fallthru
      _
    // Predicated region
    $region10: #{tpu_custom_call.1} parent=1 // pred_check
      _
    $region11: #{tpu_custom_call.1} parent=1 // pred_check_branch
      %25 = sbr.rel (0) target = $region13
    $region12: #{tpu_custom_call.1} parent=1 // pred_region
      _
    $region13: #{tpu_custom_call.1} parent=1 // pred_fallthru
      _
    // Predicated region
    $region14: #{tpu_custom_call.1} parent=1 // pred_check
      _
    $region15: #{tpu_custom_call.1} parent=1 // pred_check_branch
      %27 = sbr.rel (0) target = $region17
    $region16: #{tpu_custom_call.1} parent=1 // pred_region
      %28 = dma.done [#allocation3], 1024
    $region17: #{tpu_custom_call.1} parent=1 // pred_fallthru
      _
    %v29 = vld [vmem:[#allocation2] sm:$0xff]
    %v30 = vld [vmem:[#allocation2 + $0x8] sm:$0xff]
    %v31 = vld [vmem:[#allocation2 + $0x10] sm:$0xff]
    %v32 = vld [vmem:[#allocation2 + $0x18] sm:$0xff]
    %v33 = vld [vmem:[#allocation2 + $0x20] sm:$0xff]
    %v34 = vld [vmem:[#allocation2 + $0x28] sm:$0xff]
    %v35 = vld [vmem:[#allocation2 + $0x30] sm:$0xff]
    %v36 = vld [vmem:[#allocation2 + $0x38] sm:$0xff]
    %37 = vadd.xlane.f32.xlu0 %v29
    %v38 = vpop.xlane.xlu0 %37
    %39 = vadd.xlane.f32.xlu0 %v30
    %v40 = vpop.xlane.xlu0 %39
    %41 = vadd.xlane.f32.xlu0 %v31
    %v42 = vpop.xlane.xlu0 %41
    %43 = vadd.xlane.f32.xlu0 %v32
    %v44 = vpop.xlane.xlu0 %43
    %45 = vadd.xlane.f32.xlu0 %v33
    %v46 = vpop.xlane.xlu0 %45
    %47 = vadd.xlane.f32.xlu0 %v34
    %v48 = vpop.xlane.xlu0 %47
    %49 = vadd.xlane.f32.xlu0 %v35
    %v50 = vpop.xlane.xlu0 %49
    %51 = vadd.xlane.f32.xlu0 %v36
    %v52 = vpop.xlane.xlu0 %51
    %v53 = vmul.f32 %v38, 0.015625
    %v54 = vmul.f32 %v40, 0.015625
    %v55 = vmul.f32 %v42, 0.015625
    %v56 = vmul.f32 %v44, 0.015625
    %v57 = vmul.f32 %v46, 0.015625
    %v58 = vmul.f32 %v48, 0.015625
    %v59 = vmul.f32 %v50, 0.015625
    %v60 = vmul.f32 %v52, 0.015625
    %v61 = vld [vmem:[%s1] sm:$0xff]
    %v62 = vld [vmem:[%s1 + $0x8] sm:$0xff]
    %v63 = vld [vmem:[%s1 + $0x10] sm:$0xff]
    %v64 = vld [vmem:[%s1 + $0x18] sm:$0xff]
    %v65 = vld [vmem:[%s2] sm:$0x3]
    %v74 = vlaneseq
    %v75 = vand.u32 %v74, 127
    %v76 = vlaneseq
    %v77 = vshrl.u32 %v76, 7
    %v78 = vsub.s32 %v75, %v77
    %v79 = vrot.slane %v53, %v78
    %v80 = vadd.s32 %v75, 4294967288
    %v81 = vlaneseq
    %v82 = vshrl.u32 %v81, 7
    %v83 = vsub.s32 %v80, %v82
    %v84 = vrot.slane %v54, %v83
    %vm85 = vcmask 130112
    %v86 = vsel %vm85, %v84, %v79
    %v87 = vadd.s32 %v75, 4294967280
    %v88 = vlaneseq
    %v89 = vshrl.u32 %v88, 7
    %v90 = vsub.s32 %v87, %v89
    %v91 = vrot.slane %v55, %v90
    %vm92 = vcmask 195712
    %v93 = vsel %vm92, %v91, %v86
    %v94 = vadd.s32 %v75, 4294967272
    %v95 = vlaneseq
    %v96 = vshrl.u32 %v95, 7
    %v97 = vsub.s32 %v94, %v96
    %v98 = vrot.slane %v56, %v97
    %vm99 = vcmask 261312
    %v100 = vsel %vm99, %v98, %v93
    %v101 = vlaneseq
    %v102 = vshrl.u32 %v101, 7
    %v103 = vsub.s32 %v75, %v102
    %v104 = vrot.slane %v57, %v103
    %v105 = vlaneseq
    %v106 = vshrl.u32 %v105, 7
    %v107 = vsub.s32 %v80, %v106
    %v108 = vrot.slane %v58, %v107
    %v109 = vsel %vm85, %v108, %v104
    %v110 = vlaneseq
    %v111 = vshrl.u32 %v110, 7
    %v112 = vsub.s32 %v87, %v111
    %v113 = vrot.slane %v59, %v112
    %v114 = vsel %vm92, %v113, %v109
    %v115 = vlaneseq
    %v116 = vshrl.u32 %v115, 7
    %v117 = vsub.s32 %v94, %v116
    %v118 = vrot.slane %v60, %v117
    %v119 = vsel %vm99, %v118, %v114
    %vm120 = vcmask 1041409
    %v121 = vsel %vm120, %v119, %v100
    %vm122 = vcmask 261120
    %v123 = vsel %vm122, %v121, 0
    %125 = vmatprep.subr.mxu0 0.0
    %126 = vmatpush1.msra.mxu0 0.0
    %127 = vmatprep.subr.mxu0 0.0
    %128 = vmatpush1.msra.mxu0 0.0
    %129 = vmatprep.subr.mxu0 0.0
    %130 = vmatpush1.msra.mxu0 0.0
    %131 = vmatprep.subr.mxu0 0.0
    %132 = vmatpush1.msra.mxu0 0.0
    %133 = vmatprep.subr.mxu0 0.0
    %134 = vmatpush1.msra.mxu0 0.0
    %135 = vmatprep.subr.mxu0 0.0
    %136 = vmatpush1.msra.mxu0 0.0
    %137 = vmatprep.subr.mxu0 0.0
    %138 = vmatpush1.msra.mxu0 0.0
    %139 = vmatprep.subr.mxu0 0.0
    %140 = vmatpush1.msra.mxu0 0.0
    %141 = vmatprep.subr.mxu0 0.0
    %142 = vmatpush1.msra.mxu0 0.0
    %143 = vmatprep.subr.mxu0 0.0
    %144 = vmatpush1.msra.mxu0 0.0
    %145 = vmatprep.subr.mxu0 0.0
    %146 = vmatpush1.msra.mxu0 0.0
    %147 = vmatprep.subr.mxu0 0.0
    %148 = vmatpush1.msra.mxu0 0.0
    %149 = vmatprep.subr.mxu0 0.0
    %150 = vmatpush1.msra.mxu0 %v64
    %151 = vmatprep.subr.mxu0 0.0
    %152 = vmatpush1.msra.mxu0 %v63
    %153 = vmatprep.subr.mxu0 0.0
    %154 = vmatpush1.msra.mxu0 %v62
    %155 = vmatprep.subr.mxu0 0.0
    %156 = vmatpush1.msra.mxu0 %v61
    %157 = vmatprep.subr.mxu0 0.0
    %158 = vmatpush2.msra.mxu0 0.0
    %159 = vmatprep.subr.mxu0 0.0
    %160 = vmatpush2.msra.mxu0 0.0
    %161 = vmatprep.subr.mxu0 0.0
    %162 = vmatpush2.msra.mxu0 0.0
    %163 = vmatprep.subr.mxu0 0.0
    %164 = vmatpush2.msra.mxu0 0.0
    %165 = vmatprep.subr.mxu0 0.0
    %166 = vmatpush2.msra.mxu0 0.0
    %167 = vmatprep.subr.mxu0 0.0
    %168 = vmatpush2.msra.mxu0 0.0
    %169 = vmatprep.subr.mxu0 0.0
    %170 = vmatpush2.msra.mxu0 0.0
    %171 = vmatprep.subr.mxu0 0.0
    %172 = vmatpush2.msra.mxu0 0.0
    %173 = vmatprep.subr.mxu0 0.0
    %174 = vmatpush2.msra.mxu0 0.0
    %175 = vmatprep.subr.mxu0 0.0
    %176 = vmatpush2.msra.mxu0 0.0
    %177 = vmatprep.subr.mxu0 0.0
    %178 = vmatpush2.msra.mxu0 0.0
    %179 = vmatprep.subr.mxu0 0.0
    %180 = vmatpush2.msra.mxu0 0.0
    %181 = vmatprep.subr.mxu0 0.0
    %182 = vmatpush2.msra.mxu0 0.0
    %183 = vmatprep.subr.mxu0 0.0
    %184 = vmatpush2.msra.mxu0 0.0
    %185 = vmatprep.subr.mxu0 0.0
    %186 = vmatpush2.msra.mxu0 0.0
    %187 = vmatprep.subr.mxu0 0.0
    %188 = vmatpush2.msra.mxu0 0.0
    %189 = vmatprep.mubr.f32.mxu0 0.0
    %190 = vmatmul.mubr.f32.gmra.mxu0 %v123
    %v191 = vpop.f32.mrf.mxu0
    %v192 = vadd.f32 0.0, %v191
    %v193 = vpop.f32.mrf.mxu0
    %194 = vdwg.mxu0
    %v195 = vmax.f32 %v192, 0.0
    %vm196 = vcmask 15360
    %v198 = vsel %vm196, %v195, 0
    %vm200 = vcmask 1041408
    %v202 = vsel %vm200, %v65, 0
    %204 = vmatprep.subr.mxu0 0.0
    %205 = vmatpush1.msra.mxu0 0.0
    %206 = vmatprep.subr.mxu0 0.0
    %207 = vmatpush1.msra.mxu0 0.0
    %208 = vmatprep.subr.mxu0 0.0
    %209 = vmatpush1.msra.mxu0 0.0
    %210 = vmatprep.subr.mxu0 0.0
    %211 = vmatpush1.msra.mxu0 0.0
    %212 = vmatprep.subr.mxu0 0.0
    %213 = vmatpush1.msra.mxu0 0.0
    %214 = vmatprep.subr.mxu0 0.0
    %215 = vmatpush1.msra.mxu0 0.0
    %216 = vmatprep.subr.mxu0 0.0
    %217 = vmatpush1.msra.mxu0 0.0
    %218 = vmatprep.subr.mxu0 0.0
    %219 = vmatpush1.msra.mxu0 0.0
    %220 = vmatprep.subr.mxu0 0.0
    %221 = vmatpush1.msra.mxu0 0.0
    %222 = vmatprep.subr.mxu0 0.0
    %223 = vmatpush1.msra.mxu0 0.0
    %224 = vmatprep.subr.mxu0 0.0
    %225 = vmatpush1.msra.mxu0 0.0
    %226 = vmatprep.subr.mxu0 0.0
    %227 = vmatpush1.msra.mxu0 0.0
    %228 = vmatprep.subr.mxu0 0.0
    %229 = vmatpush1.msra.mxu0 0.0
    %230 = vmatprep.subr.mxu0 0.0
    %231 = vmatpush1.msra.mxu0 0.0
    %232 = vmatprep.subr.mxu0 0.0
    %233 = vmatpush1.msra.mxu0 0.0
    %234 = vmatprep.subr.mxu0 0.0
    %235 = vmatpush1.msra.mxu0 %v202
    %236 = vmatprep.subr.mxu0 0.0
    %237 = vmatpush2.msra.mxu0 0.0
    %238 = vmatprep.subr.mxu0 0.0
    %239 = vmatpush2.msra.mxu0 0.0
    %240 = vmatprep.subr.mxu0 0.0
    %241 = vmatpush2.msra.mxu0 0.0
    %242 = vmatprep.subr.mxu0 0.0
    %243 = vmatpush2.msra.mxu0 0.0
    %244 = vmatprep.subr.mxu0 0.0
    %245 = vmatpush2.msra.mxu0 0.0
    %246 = vmatprep.subr.mxu0 0.0
    %247 = vmatpush2.msra.mxu0 0.0
    %248 = vmatprep.subr.mxu0 0.0
    %249 = vmatpush2.msra.mxu0 0.0
    %250 = vmatprep.subr.mxu0 0.0
    %251 = vmatpush2.msra.mxu0 0.0
    %252 = vmatprep.subr.mxu0 0.0
    %253 = vmatpush2.msra.mxu0 0.0
    %254 = vmatprep.subr.mxu0 0.0
    %255 = vmatpush2.msra.mxu0 0.0
    %256 = vmatprep.subr.mxu0 0.0
    %257 = vmatpush2.msra.mxu0 0.0
    %258 = vmatprep.subr.mxu0 0.0
    %259 = vmatpush2.msra.mxu0 0.0
    %260 = vmatprep.subr.mxu0 0.0
    %261 = vmatpush2.msra.mxu0 0.0
    %262 = vmatprep.subr.mxu0 0.0
    %263 = vmatpush2.msra.mxu0 0.0
    %264 = vmatprep.subr.mxu0 0.0
    %265 = vmatpush2.msra.mxu0 0.0
    %266 = vmatprep.subr.mxu0 0.0
    %267 = vmatpush2.msra.mxu0 0.0
    %268 = vmatprep.mubr.f32.mxu0 0.0
    %269 = vmatmul.mubr.f32.gmra.mxu0 %v198
    %v270 = vpop.f32.mrf.mxu0
    %v271 = vadd.f32 0.0, %v270
    %v272 = vpop.f32.mrf.mxu0
    %273 = vdwg.mxu0
    %v274 = vxor.u32 %v271, 2147483648
    %v275 = vmul.f32 %v274, 1.442695
    %v276 = vpow.pop %v275
    %v277 = vadd.f32 %v276, 1.0
    %v278 = vrcp.pop %v277
    %v279 = vmul.f32 1.0, %v278
    %v280 = vlaneseq
    %v281 = vshrl.u32 %v280, 7
    %v282 = vsub.s32 0, %v281
    %v283 = vrot.slane %v279, %v282
    %285 = vbcast.lane.b32.xlu0 %v283, 256
    %v286 = vpop.permute.xlu0 %285
    %s288 = sor.u32 256, 8
    %289 = vbcast.lane.b32.xlu0 %v283, %s288
    %v290 = vpop.permute.xlu0 %289
    %s292 = sor.u32 256, 16
    %293 = vbcast.lane.b32.xlu0 %v283, %s292
    %v294 = vpop.permute.xlu0 %293
    %s296 = sor.u32 256, 24
    %297 = vbcast.lane.b32.xlu0 %v283, %s296
    %v298 = vpop.permute.xlu0 %297
    %v299 = vlaneseq
    %v300 = vshrl.u32 %v299, 7
    %v301 = vsub.s32 1, %v300
    %v302 = vrot.slane %v279, %v301
    %304 = vbcast.lane.b32.xlu0 %v302, 256
    %v305 = vpop.permute.xlu0 %304
    %s307 = sor.u32 256, 8
    %308 = vbcast.lane.b32.xlu0 %v302, %s307
    %v309 = vpop.permute.xlu0 %308
    %s311 = sor.u32 256, 16
    %312 = vbcast.lane.b32.xlu0 %v302, %s311
    %v313 = vpop.permute.xlu0 %312
    %s315 = sor.u32 256, 24
    %316 = vbcast.lane.b32.xlu0 %v302, %s315
    %v317 = vpop.permute.xlu0 %316
    %v318 = vmul.f32 %v29, %v286
    %v319 = vmul.f32 %v30, %v290
    %v320 = vmul.f32 %v31, %v294
    %v321 = vmul.f32 %v32, %v298
    %v322 = vmul.f32 %v33, %v305
    %v323 = vmul.f32 %v34, %v309
    %v324 = vmul.f32 %v35, %v313
    %v325 = vmul.f32 %v36, %v317
    %326 = vst [vmem:[#allocation5] sm:$0xff] %v318
    %327 = vst [vmem:[#allocation5 + $0x8] sm:$0xff] %v319
    %328 = vst [vmem:[#allocation5 + $0x10] sm:$0xff] %v320
    %329 = vst [vmem:[#allocation5 + $0x18] sm:$0xff] %v321
    %330 = vst [vmem:[#allocation5 + $0x20] sm:$0xff] %v322
    %331 = vst [vmem:[#allocation5 + $0x28] sm:$0xff] %v323
    %332 = vst [vmem:[#allocation5 + $0x30] sm:$0xff] %v324
    %333 = vst [vmem:[#allocation5 + $0x38] sm:$0xff] %v325
    // Predicated region
    $region18: #{tpu_custom_call.1} parent=1 // pred_check
      _
    $region19: #{tpu_custom_call.1} parent=1 // pred_check_branch
      %335 = sbr.rel (0) target = $region21
    $region20: #{tpu_custom_call.1} parent=1 // pred_region
      %s337 = ssub.s32 1024, 1024
      %338 = vsyncadd [#allocation4], %s337
      %s339 = sshll.u32 [#allocation5], 4
      %s340 = int_to_ptr.vmem [resolvable:$true] %s339
      %345 = dma.vmem_to_hbm [thread:$0]  %s340, 1024, %s3, [#allocation4], 128, 128, 8
    $region21: #{tpu_custom_call.1} parent=1 // pred_fallthru
      _
    // Predicated region
    $region22: #{tpu_custom_call.1} parent=1 // pred_check
      _
    $region23: #{tpu_custom_call.1} parent=1 // pred_check_branch
      %347 = sbr.rel (0) target = $region25
    $region24: #{tpu_custom_call.1} parent=1 // pred_region
      %348 = dma.done [#allocation4], 1024
    $region25: #{tpu_custom_call.1} parent=1 // pred_fallthru
      _
    %349 = vsyncpa [#allocation3], 1
    %350 = vsyncpa [#allocation4], 1

</llo_original>
